<compile_context>
chip_gen: v7x
topology: tpu7x:2x2x1
jax: 0.10.0
libtpu: 0.0.40
codegen_flags: <defaults>
</compile_context>

<pallas_src>
import jax
import jax.numpy as jnp
from jax.experimental import pallas as pl
from jax.experimental.pallas import tpu as pltpu


def _fused_nvp_kernel(x_ref, c_ref, wx_ref, wc_ref, b_ref, y_ref, ld_ref):
    """Fused conditional real-NVP forward over all coupling blocks.

    Grid: (batch_tile i [parallel], block k [arbitrary]).
    x_ref  : [TB, D]        input batch tile (resident across k)
    c_ref  : [TB, C]        condition tile   (resident across k)
    wx_ref : [1, D1, 2*D2]  per-block weight acting on the passive half
    wc_ref : [1, C,  2*D2]  per-block weight acting on the condition
    b_ref  : [1, 1,  2*D2]  per-block bias
    y_ref  : [TB, D]        running x / final output (VMEM-resident across k)
    ld_ref : [TB, 1]        running per-sample log|det J|
    """
    k = pl.program_id(1)
    d = y_ref.shape[1]
    d1 = d // 2
    d2 = d - d1

    @pl.when(k == 0)
    def _():
        y_ref[...] = x_ref[...]
        ld_ref[...] = jnp.zeros_like(ld_ref)

    x1 = y_ref[:, :d1]          # passive half
    x2 = y_ref[:, d1:]          # active half

    # Two MXU dots replace concat([x1, cond]) @ W.
    h = jnp.dot(x1, wx_ref[0], preferred_element_type=jnp.float32)
    h = h + jnp.dot(c_ref[...], wc_ref[0], preferred_element_type=jnp.float32)
    h = h + b_ref[0]

    s = jnp.tanh(h[:, :d2])                      # bounded log-scale (EUP)
    t = h[:, d2:]                                # translation
    y2 = x2 * jnp.exp(s) + t                     # VPU + EUP

    ld_ref[...] = ld_ref[...] + jnp.sum(s, axis=1, keepdims=True)

    # swap halves so the next block transforms the other half
    y_ref[:, :d2] = y2
    y_ref[:, d2:] = x1


def _pick_batch_tile(B, max_tile=512):
    if B <= max_tile:
        return B
    for t in (512, 256, 128, 64, 32, 16, 8):
        if t <= max_tile and B % t == 0:
            return t
    return B


def nvp_forward(x, condition, wx, wc, bias):
    """x: [B, D], condition: [B, C], wx: [n, D1, 2*D2], wc: [n, C, 2*D2],
    bias: [n, 1, 2*D2].  Returns (y [B, D], log_det [B, 1])."""
    B, D = x.shape
    C = condition.shape[1]
    n_blocks, d1, two_d2 = wx.shape
    d2 = two_d2 // 2

    tb = _pick_batch_tile(B)
    grid = (B // tb, n_blocks)

    y, ld = pl.pallas_call(
        _fused_nvp_kernel,
        out_shape=(
            jax.ShapeDtypeStruct((B, D), jnp.float32),
            jax.ShapeDtypeStruct((B, 1), jnp.float32),
        ),
        grid=grid,
        in_specs=[
            pl.BlockSpec((tb, D), lambda i, k: (i, 0)),          # x (resident over k)
            pl.BlockSpec((tb, C), lambda i, k: (i, 0)),          # condition
            pl.BlockSpec((1, d1, two_d2), lambda i, k: (k, 0, 0)),  # W_x1 per block
            pl.BlockSpec((1, C, two_d2), lambda i, k: (k, 0, 0)),   # W_c  per block
            pl.BlockSpec((1, 1, two_d2), lambda i, k: (k, 0, 0)),   # bias per block
        ],
        out_specs=(
            pl.BlockSpec((tb, D), lambda i, k: (i, 0)),          # VMEM-resident accumulators
            pl.BlockSpec((tb, 1), lambda i, k: (i, 0)),
        ),
        compiler_params=pltpu.CompilerParams(
            dimension_semantics=("parallel", "arbitrary"),
            vmem_limit_bytes=32 * 1024 * 1024,
        ),
    )(x, condition, wx, wc, bias)
    return y, ld


class NvpPallas:
    """Mirror of the PyTorch `Nvp` interface (forward + get_det)."""

    def __init__(self, blocks=()):
        # each block is a (W, b) pair: W [D1 + C, 2*D2], b [1, 2*D2]
        self.blocks = list(blocks)
        self._log_det = None

    def forward(self, x, condition):
        B, D = x.shape
        d1 = D // 2
        if not self.blocks:
            self._log_det = jnp.zeros((B, 1), jnp.float32)
            return x
        W = jnp.stack([w for w, _ in self.blocks]).astype(jnp.float32)     # [n, D1+C, 2*D2]
        bias = jnp.stack([b for _, b in self.blocks]).astype(jnp.float32)  # [n, 1, 2*D2]
        wx = W[:, :d1, :]
        wc = W[:, d1:, :]
        y, ld = nvp_forward(x.astype(jnp.float32), condition.astype(jnp.float32),
                            wx, wc, bias)
        self._log_det = ld
        return y

    def get_det(self):
        return self._log_det


def make_block_params(key, d1, d2, c):
    kw, kb = jax.random.split(key)
    w = 0.05 * jax.random.normal(kw, (d1 + c, 2 * d2), dtype=jnp.float32)
    b = 0.01 * jax.random.normal(kb, (1, 2 * d2), dtype=jnp.float32)
    return w, b


if __name__ == "__main__":
    B, D, C = 8, 32, 16          # batch, flow dimension, condition dimension
    d1 = d2 = D // 2
    n_blocks = 2

    key = jax.random.PRNGKey(0)
    kx, kc, *kblocks = jax.random.split(key, 2 + n_blocks)
    x = jax.random.normal(kx, (B, D), dtype=jnp.float32)
    condition = jax.random.normal(kc, (B, C), dtype=jnp.float32)

    blocks = [make_block_params(k, d1, d2, C) for k in kblocks]

    nvp = NvpPallas(blocks)
    y = nvp.forward(x, condition)
    log_det = nvp.get_det()

    jax.block_until_ready(y)
    jax.block_until_ready(log_det)

    assert y.shape == (B, D)
    assert log_det.shape == (B, 1)
    assert bool(jnp.all(jnp.isfinite(y))) and bool(jnp.all(jnp.isfinite(log_det)))

    # pure-JAX reference of the same coupling semantics
    def ref_forward(x, cond, blocks):
        ld = jnp.zeros((x.shape[0], 1), jnp.float32)
        for w, b in blocks:
            x1, x2 = x[:, :d1], x[:, d1:]
            h = jnp.concatenate([x1, cond], axis=1) @ w + b
            s = jnp.tanh(h[:, :d2])
            t = h[:, d2:]
            y2 = x2 * jnp.exp(s) + t
            ld = ld + jnp.sum(s, axis=1, keepdims=True)
            x = jnp.concatenate([y2, x1], axis=1)
        return x, ld

    y_ref, ld_ref = ref_forward(x, condition, blocks)
    assert jnp.allclose(y, y_ref, atol=1e-5, rtol=1e-5)
    assert jnp.allclose(log_det, ld_ref, atol=1e-5, rtol=1e-5)

    # empty-blocks stub case: identity, zero log-det
    nvp_empty = NvpPallas([])
    y0 = nvp_empty.forward(x, condition)
    assert jnp.allclose(y0, x) and jnp.allclose(nvp_empty.get_det(), 0.0)

    print("KERNEL_OK")
</pallas_src>

<mosaic_0001>
module attributes {stable_mosaic.version = 11 : i64} {
  func.func @_fused_nvp_kernel(%arg0: i32, %arg1: i32, %arg2: memref<8x32xf32, #tpu.memory_space<vmem>>, %arg3: memref<8x16xf32, #tpu.memory_space<vmem>>, %arg4: memref<1x16x32xf32, #tpu.memory_space<vmem>>, %arg5: memref<1x16x32xf32, #tpu.memory_space<vmem>>, %arg6: memref<1x1x32xf32, #tpu.memory_space<vmem>>, %arg7: memref<8x32xf32, #tpu.memory_space<vmem>>, %arg8: memref<8x1xf32, #tpu.memory_space<vmem>>) attributes {dimension_semantics = [#tpu.dimension_semantics<parallel>, #tpu.dimension_semantics<arbitrary>], iteration_bounds = array<i64: 1, 2>, scalar_prefetch = 0 : i64, scratch_operands = 0 : i64, tpu.core_type = #tpu.core_type<tc>, window_params = [{transform_indices = @transform_0, window_bounds = array<i64: 8, 32>}, {transform_indices = @transform_1, window_bounds = array<i64: 8, 16>}, {transform_indices = @transform_2, window_bounds = array<i64: 1, 16, 32>}, {transform_indices = @transform_3, window_bounds = array<i64: 1, 16, 32>}, {transform_indices = @transform_4, window_bounds = array<i64: 1, 1, 32>}, {transform_indices = @transform_5, window_bounds = array<i64: 8, 32>}, {transform_indices = @transform_6, window_bounds = array<i64: 8, 1>}]} {
    %c0_i32 = arith.constant 0 : i32
    %0 = arith.cmpi eq, %arg1, %c0_i32 : i32
    %1 = arith.extui %0 : i1 to i32
    %c0_i32_0 = arith.constant 0 : i32
    %2 = arith.cmpi ne, %1, %c0_i32_0 : i32
    scf.if %2 {
      %c0_24 = arith.constant 0 : index
      %c0_25 = arith.constant 0 : index
      %30 = vector.load %arg2[%c0_24, %c0_25] : memref<8x32xf32, #tpu.memory_space<vmem>>, vector<8x32xf32>
      %c0_26 = arith.constant 0 : index
      %c0_27 = arith.constant 0 : index
      %31 = vector.load %arg7[%c0_26, %c0_27] : memref<8x32xf32, #tpu.memory_space<vmem>>, vector<8x32xf32>
      tpu.vector_store %arg7[%c0_26, %c0_27], %30 {strides = array<i32>} : memref<8x32xf32, #tpu.memory_space<vmem>>, vector<8x32xf32>,
      %cst_28 = arith.constant 0.000000e+00 : f32
      %32 = vector.broadcast %cst_28 : f32 to vector<8x1xf32>
      %c0_29 = arith.constant 0 : index
      %c0_30 = arith.constant 0 : index
      %33 = vector.load %arg8[%c0_29, %c0_30] : memref<8x1xf32, #tpu.memory_space<vmem>>, vector<8x1xf32>
      tpu.vector_store %arg8[%c0_29, %c0_30], %32 {strides = array<i32>} : memref<8x1xf32, #tpu.memory_space<vmem>>, vector<8x1xf32>,
    } else {
    }
    %c0 = arith.constant 0 : index
    %c0_1 = arith.constant 0 : index
    %3 = vector.load %arg7[%c0, %c0_1] : memref<8x32xf32, #tpu.memory_space<vmem>>, vector<8x16xf32>
    %c0_2 = arith.constant 0 : index
    %c16 = arith.constant 16 : index
    %4 = vector.load %arg7[%c0_2, %c16] : memref<8x32xf32, #tpu.memory_space<vmem>>, vector<8x16xf32>
    %c0_3 = arith.constant 0 : index
    %c0_4 = arith.constant 0 : index
    %c0_5 = arith.constant 0 : index
    %5 = vector.load %arg4[%c0_3, %c0_4, %c0_5] : memref<1x16x32xf32, #tpu.memory_space<vmem>>, vector<1x16x32xf32>
    %6 = vector.shape_cast %5 : vector<1x16x32xf32> to vector<16x32xf32>
    %cst = arith.constant dense<0.000000e+00> : vector<8x32xf32>
    %7 = tpu.matmul %3, %6, %cst {dimension_numbers = #tpu.dot_dimension_numbers<[1], [0], [0], [1], [0, 0, 1, 1], [], []>} : vector<8x16xf32>, vector<16x32xf32>, vector<8x32xf32> -> vector<8x32xf32>
    %c0_6 = arith.constant 0 : index
    %c0_7 = arith.constant 0 : index
    %8 = vector.load %arg3[%c0_6, %c0_7] : memref<8x16xf32, #tpu.memory_space<vmem>>, vector<8x16xf32>
    %c0_8 = arith.constant 0 : index
    %c0_9 = arith.constant 0 : index
    %c0_10 = arith.constant 0 : index
    %9 = vector.load %arg5[%c0_8, %c0_9, %c0_10] : memref<1x16x32xf32, #tpu.memory_space<vmem>>, vector<1x16x32xf32>
    %10 = vector.shape_cast %9 : vector<1x16x32xf32> to vector<16x32xf32>
    %cst_11 = arith.constant dense<0.000000e+00> : vector<8x32xf32>
    %11 = tpu.matmul %8, %10, %cst_11 {dimension_numbers = #tpu.dot_dimension_numbers<[1], [0], [0], [1], [0, 0, 1, 1], [], []>} : vector<8x16xf32>, vector<16x32xf32>, vector<8x32xf32> -> vector<8x32xf32>
    %12 = arith.addf %7, %11 : vector<8x32xf32>
    %c0_12 = arith.constant 0 : index
    %c0_13 = arith.constant 0 : index
    %c0_14 = arith.constant 0 : index
    %13 = vector.load %arg6[%c0_12, %c0_13, %c0_14] : memref<1x1x32xf32, #tpu.memory_space<vmem>>, vector<1x1x32xf32>
    %14 = vector.shape_cast %13 : vector<1x1x32xf32> to vector<1x32xf32>
    %15 = vector.broadcast %14 : vector<1x32xf32> to vector<8x32xf32>
    %16 = arith.addf %12, %15 : vector<8x32xf32>
    %17 = vector.extract_strided_slice %16 {offsets = [0, 0], sizes = [8, 16], strides = [1, 1]} : vector<8x32xf32> to vector<8x16xf32>
    %18 = math.tanh %17 : vector<8x16xf32>
    %19 = vector.extract_strided_slice %16 {offsets = [0, 16], sizes = [8, 16], strides = [1, 1]} : vector<8x32xf32> to vector<8x16xf32>
    %20 = math.exp %18 : vector<8x16xf32>
    %21 = arith.mulf %4, %20 : vector<8x16xf32>
    %22 = arith.addf %21, %19 : vector<8x16xf32>
    %c0_15 = arith.constant 0 : index
    %c0_16 = arith.constant 0 : index
    %23 = vector.load %arg8[%c0_15, %c0_16] : memref<8x1xf32, #tpu.memory_space<vmem>>, vector<8x1xf32>
    %cst_17 = arith.constant dense<0.000000e+00> : vector<8xf32>
    %24 = vector.multi_reduction <add>, %18, %cst_17 [1] : vector<8x16xf32> to vector<8xf32>
    %25 = vector.shape_cast %24 : vector<8xf32> to vector<8x1xf32>
    %26 = arith.addf %23, %25 : vector<8x1xf32>
    %c0_18 = arith.constant 0 : index
    %c0_19 = arith.constant 0 : index
    %27 = vector.load %arg8[%c0_18, %c0_19] : memref<8x1xf32, #tpu.memory_space<vmem>>, vector<8x1xf32>
    tpu.vector_store %arg8[%c0_18, %c0_19], %26 {strides = array<i32>} : memref<8x1xf32, #tpu.memory_space<vmem>>, vector<8x1xf32>,
    %c0_20 = arith.constant 0 : index
    %c0_21 = arith.constant 0 : index
    %28 = vector.load %arg7[%c0_20, %c0_21] : memref<8x32xf32, #tpu.memory_space<vmem>>, vector<8x16xf32>
    tpu.vector_store %arg7[%c0_20, %c0_21], %22 {strides = array<i32>} : memref<8x32xf32, #tpu.memory_space<vmem>>, vector<8x16xf32>,
    %c0_22 = arith.constant 0 : index
    %c16_23 = arith.constant 16 : index
    %29 = vector.load %arg7[%c0_22, %c16_23] : memref<8x32xf32, #tpu.memory_space<vmem>>, vector<8x16xf32>
    tpu.vector_store %arg7[%c0_22, %c16_23], %3 {strides = array<i32>} : memref<8x32xf32, #tpu.memory_space<vmem>>, vector<8x16xf32>,
    return
  }
  func.func @transform_0(%arg0: i32, %arg1: i32) -> (i32, i32) {
    %c0_i32 = arith.constant 0 : i32
    %c0_i32_0 = arith.constant 0 : i32
    return %arg0, %c0_i32 : i32, i32
  }
  func.func @transform_1(%arg0: i32, %arg1: i32) -> (i32, i32) {
    %c0_i32 = arith.constant 0 : i32
    %c0_i32_0 = arith.constant 0 : i32
    return %arg0, %c0_i32 : i32, i32
  }
  func.func @transform_2(%arg0: i32, %arg1: i32) -> (i32, i32, i32) {
    %c0_i32 = arith.constant 0 : i32
    %c0_i32_0 = arith.constant 0 : i32
    %c0_i32_1 = arith.constant 0 : i32
    return %arg1, %c0_i32, %c0_i32_0 : i32, i32, i32
  }
  func.func @transform_3(%arg0: i32, %arg1: i32) -> (i32, i32, i32) {
    %c0_i32 = arith.constant 0 : i32
    %c0_i32_0 = arith.constant 0 : i32
    %c0_i32_1 = arith.constant 0 : i32
    return %arg1, %c0_i32, %c0_i32_0 : i32, i32, i32
  }
  func.func @transform_4(%arg0: i32, %arg1: i32) -> (i32, i32, i32) {
    %c0_i32 = arith.constant 0 : i32
    %c0_i32_0 = arith.constant 0 : i32
    %c0_i32_1 = arith.constant 0 : i32
    return %arg1, %c0_i32, %c0_i32_0 : i32, i32, i32
  }
  func.func @transform_5(%arg0: i32, %arg1: i32) -> (i32, i32) {
    %c0_i32 = arith.constant 0 : i32
    %c0_i32_0 = arith.constant 0 : i32
    return %arg0, %c0_i32 : i32, i32
  }
  func.func @transform_6(%arg0: i32, %arg1: i32) -> (i32, i32) {
    %c0_i32 = arith.constant 0 : i32
    %c0_i32_0 = arith.constant 0 : i32
    return %arg0, %c0_i32 : i32, i32
  }
}

</mosaic_0001>

<llo_original>
// kernel: tpu_custom_call.1
$region0: #{tpu_custom_call.1}
  #allocation0 [shape = 'u32[]', space=smem, size = 0x4, offset = 0x4, fixed_abs, tag = 'smem constant byte address 0x4 - core index']
  #allocation1 [shape = 'u32[144,128]{1,0:T(1,128)}', space=vmem, size = 0x12000, scoped, tag = 'internal scratch']
  %s0 = inlined_call_operand.hbm [shape: f32[8,32], index: 0, kind: input, shape index: {}]
  %s1 = inlined_call_operand.hbm [shape: f32[8,16], index: 1, kind: input, shape index: {}]
  %s2 = inlined_call_operand.hbm [shape: f32[2,16,32], index: 2, kind: input, shape index: {}]
  %s3 = inlined_call_operand.hbm [shape: f32[2,16,32], index: 3, kind: input, shape index: {}]
  %s4 = inlined_call_operand.vmem [shape: f32[2,1,32], index: 4, kind: input, shape index: {}]
  %s5 = inlined_call_operand.hbm [shape: f32[8,32], index: 5, kind: output, shape index: {0}]
  %s6 = inlined_call_operand.vmem [shape: f32[8,1], index: 6, kind: output, shape index: {1}]
  %7 = xla_tuple %s5, %s6
  %s8 = sld [smem:[#allocation0]]
  $region81: #{tpu_custom_call.1} parent=0
    _
  %s10 = ssub.s32 1, %s8
  %s11 = scalar_select 0, %s10, %s8
  $region1: #{tpu_custom_call.1} parent=0
    #allocation2 [shape = 'u8[4096]{0}', space=vmem, size = 0x1000, scoped, tag = 'input window, operand 0, single buffered']
    #allocation3 [shape = 's32[2]{0}', space=sflag, size = 0x8, scoped, tag = 'scoped memory for tpu_custom_call.1']
    #allocation4 [shape = 's32[2]{0}', space=sflag, size = 0x8, scoped, tag = 'scoped memory for tpu_custom_call.1']
    #allocation5 [shape = 'u8[4096]{0}', space=vmem, size = 0x1000, scoped, tag = 'input window, operand 1, single buffered']
    #allocation6 [shape = 's32[1]{0}', space=sflag, size = 0x4, scoped, tag = 'scoped memory for tpu_custom_call.1']
    #allocation7 [shape = 'u8[16384]{0}', space=vmem, size = 0x4000, scoped, tag = 'input window, operand 2']
    #allocation8 [shape = 'u8[16384]{0}', space=vmem, size = 0x4000, scoped, tag = 'input window, operand 3']
    #allocation9 [shape = 'u8[4096]{0}', space=vmem, size = 0x1000, scoped, tag = 'output window, operand 0, single buffered']
    %12 = vsyncpa [#allocation3], 0
    %13 = vsyncpa [#allocation6], 0
    %14 = vsyncpa [#allocation4], 0
    loop: start=0, step=1, limit=4
    $region2: #{tpu_custom_call.1} parent=1 // loop_pre_header
      _
    $region3: #{tpu_custom_call.1} parent=1 // loop_header
      %s16 = sphi 0, %s20
      %p17 = scmp.ge.s32.totalorder %s16, 4
      %s23 = sphi 0, %s35
      %s24 = sphi 0, %s31
      %s25 = sphi 0, %s23
      %s26 = sphi 0, %s24
      %s27 = sphi 0, %s25
      %s28 = sphi 0, %s26
      %s38 = sphi 0, %s40
      %s41 = sphi 0, %s38
      %s42 = sphi 0, %s41
      %s58 = sphi 0, %s42
      %s64 = sphi 0, %s66
      %s67 = sphi 0, %s64
      %s68 = sphi 0, %s67
      %s84 = sphi 0, %s68
      %s90 = sphi 0, %s92
      %s93 = sphi 0, %s90
      %s94 = sphi 0, %s93
      %s110 = sphi 0, %s94
      %s116 = sphi 0, %s118
      %s119 = sphi 0, %s116
      %s120 = sphi 0, %s119
      %s136 = sphi 0, %s120
      %s142 = sphi 0, %s144
      %s145 = sphi 0, %s142
      %s146 = sphi 0, %s145
      %s162 = sphi 0, %s146
      %s168 = sphi 0, %s170
      %s171 = sphi 0, %s168
      %s172 = sphi 0, %s171
      %s188 = sphi 0, %s172
      %s194 = sphi 0, %s196
      %s197 = sphi 0, %s194
      %s198 = sphi 0, %s197
      %s214 = sphi 0, %s198
    $region4: #{tpu_custom_call.1} parent=1 // loop_header_branch
      %19 = sbr.rel (%p17) target = $region8
    $region5: #{tpu_custom_call.1} parent=1 // loop_body
      %s21 = ssub.s32 %s16, 1
      %s22 = ssub.s32 %s16, 2
      %s29 = sadd.s32 1, %s24
      %p30 = scmp.ge.s32.totalorder %s29, 2
      %s31 = scalar_select %p30, 0, %s29
      %s32 = sadd.s32 1, %s23
      %s33 = scalar_select %p30, %s32, %s23
      %p34 = scmp.ge.s32.totalorder %s33, 1
      %s35 = scalar_select %p34, 0, %s33
      %s36 = ssub.s32 %s23, %s35
      %p37 = scmp.eq.s32.totalorder %s36, 0
      %s39 = sadd.s32 %s38, 1
      %s40 = scalar_select %p37, %s38, %s39
      %p43 = pneg %p37
      %p44 = scmp.eq.s32.totalorder %s16, 1
      %p45 = por %p43, %p44
      %p46 = scmp.ne.s32.totalorder %s38, %s41
      %p47 = scmp.eq.s32.totalorder %s16, 0
      %p48 = por %p46, %p47
      %p49 = scmp.ne.s32.totalorder %s38, %s41
      %p50 = scmp.eq.s32.totalorder %s21, 1
      %p51 = por %p49, %p50
      %p52 = scmp.ne.s32.totalorder %s41, %s42
      %p53 = scmp.eq.s32.totalorder %s21, 0
      %p54 = por %p52, %p53
      %p55 = scmp.ne.s32.totalorder %s41, %s42
      %p56 = scmp.eq.s32.totalorder %s22, 1
      %p57 = por %p55, %p56
      %p59 = scmp.ne.s32.totalorder %s42, %s58
      %p60 = scmp.eq.s32.totalorder %s22, 0
      %p61 = por %p59, %p60
      %s62 = ssub.s32 %s23, %s35
      %p63 = scmp.eq.s32.totalorder %s62, 0
      %s65 = sadd.s32 %s64, 1
      %s66 = scalar_select %p63, %s64, %s65
      %p69 = pneg %p63
      %p70 = scmp.eq.s32.totalorder %s16, 1
      %p71 = por %p69, %p70
      %p72 = scmp.ne.s32.totalorder %s64, %s67
      %p73 = scmp.eq.s32.totalorder %s16, 0
      %p74 = por %p72, %p73
      %p75 = scmp.ne.s32.totalorder %s64, %s67
      %p76 = scmp.eq.s32.totalorder %s21, 1
      %p77 = por %p75, %p76
      %p78 = scmp.ne.s32.totalorder %s67, %s68
      %p79 = scmp.eq.s32.totalorder %s21, 0
      %p80 = por %p78, %p79
      %p81 = scmp.ne.s32.totalorder %s67, %s68
      %p82 = scmp.eq.s32.totalorder %s22, 1
      %p83 = por %p81, %p82
      %p85 = scmp.ne.s32.totalorder %s68, %s84
      %p86 = scmp.eq.s32.totalorder %s22, 0
      %p87 = por %p85, %p86
      %s88 = ssub.s32 %s24, %s31
      %p89 = scmp.eq.s32.totalorder %s88, 0
      %s91 = sadd.s32 %s90, 1
      %s92 = scalar_select %p89, %s90, %s91
      %p95 = pneg %p89
      %p96 = scmp.eq.s32.totalorder %s16, 1
      %p97 = por %p95, %p96
      %p98 = scmp.ne.s32.totalorder %s90, %s93
      %p99 = scmp.eq.s32.totalorder %s16, 0
      %p100 = por %p98, %p99
      %p101 = scmp.ne.s32.totalorder %s90, %s93
      %p102 = scmp.eq.s32.totalorder %s21, 1
      %p103 = por %p101, %p102
      %p104 = scmp.ne.s32.totalorder %s93, %s94
      %p105 = scmp.eq.s32.totalorder %s21, 0
      %p106 = por %p104, %p105
      %p107 = scmp.ne.s32.totalorder %s93, %s94
      %p108 = scmp.eq.s32.totalorder %s22, 1
      %p109 = por %p107, %p108
      %p111 = scmp.ne.s32.totalorder %s94, %s110
      %p112 = scmp.eq.s32.totalorder %s22, 0
      %p113 = por %p111, %p112
      %s114 = ssub.s32 %s24, %s31
      %p115 = scmp.eq.s32.totalorder %s114, 0
      %s117 = sadd.s32 %s116, 1
      %s118 = scalar_select %p115, %s116, %s117
      %p121 = pneg %p115
      %p122 = scmp.eq.s32.totalorder %s16, 1
      %p123 = por %p121, %p122
      %p124 = scmp.ne.s32.totalorder %s116, %s119
      %p125 = scmp.eq.s32.totalorder %s16, 0
      %p126 = por %p124, %p125
      %p127 = scmp.ne.s32.totalorder %s116, %s119
      %p128 = scmp.eq.s32.totalorder %s21, 1
      %p129 = por %p127, %p128
      %p130 = scmp.ne.s32.totalorder %s119, %s120
      %p131 = scmp.eq.s32.totalorder %s21, 0
      %p132 = por %p130, %p131
      %p133 = scmp.ne.s32.totalorder %s119, %s120
      %p134 = scmp.eq.s32.totalorder %s22, 1
      %p135 = por %p133, %p134
      %p137 = scmp.ne.s32.totalorder %s120, %s136
      %p138 = scmp.eq.s32.totalorder %s22, 0
      %p139 = por %p137, %p138
      %s140 = ssub.s32 %s24, %s31
      %p141 = scmp.eq.s32.totalorder %s140, 0
      %s143 = sadd.s32 %s142, 1
      %s144 = scalar_select %p141, %s142, %s143
      %p147 = pneg %p141
      %p148 = scmp.eq.s32.totalorder %s16, 1
      %p149 = por %p147, %p148
      %p150 = scmp.ne.s32.totalorder %s142, %s145
      %p151 = scmp.eq.s32.totalorder %s16, 0
      %p152 = por %p150, %p151
      %p153 = scmp.ne.s32.totalorder %s142, %s145
      %p154 = scmp.eq.s32.totalorder %s21, 1
      %p155 = por %p153, %p154
      %p156 = scmp.ne.s32.totalorder %s145, %s146
      %p157 = scmp.eq.s32.totalorder %s21, 0
      %p158 = por %p156, %p157
      %p159 = scmp.ne.s32.totalorder %s145, %s146
      %p160 = scmp.eq.s32.totalorder %s22, 1
      %p161 = por %p159, %p160
      %p163 = scmp.ne.s32.totalorder %s146, %s162
      %p164 = scmp.eq.s32.totalorder %s22, 0
      %p165 = por %p163, %p164
      %s166 = ssub.s32 %s23, %s35
      %p167 = scmp.eq.s32.totalorder %s166, 0
      %s169 = sadd.s32 %s168, 1
      %s170 = scalar_select %p167, %s168, %s169
      %p173 = pneg %p167
      %p174 = scmp.eq.s32.totalorder %s16, 1
      %p175 = por %p173, %p174
      %p176 = scmp.ne.s32.totalorder %s168, %s171
      %p177 = scmp.eq.s32.totalorder %s16, 0
      %p178 = por %p176, %p177
      %p179 = scmp.ne.s32.totalorder %s168, %s171
      %p180 = scmp.eq.s32.totalorder %s21, 1
      %p181 = por %p179, %p180
      %p182 = scmp.ne.s32.totalorder %s171, %s172
      %p183 = scmp.eq.s32.totalorder %s21, 0
      %p184 = por %p182, %p183
      %p185 = scmp.ne.s32.totalorder %s171, %s172
      %p186 = scmp.eq.s32.totalorder %s22, 1
      %p187 = por %p185, %p186
      %p189 = scmp.ne.s32.totalorder %s172, %s188
      %p190 = scmp.eq.s32.totalorder %s22, 0
      %p191 = por %p189, %p190
      %s192 = ssub.s32 %s23, %s35
      %p193 = scmp.eq.s32.totalorder %s192, 0
      %s195 = sadd.s32 %s194, 1
      %s196 = scalar_select %p193, %s194, %s195
      %p199 = pneg %p193
      %p200 = scmp.eq.s32.totalorder %s16, 1
      %p201 = por %p199, %p200
      %p202 = scmp.ne.s32.totalorder %s194, %s197
      %p203 = scmp.eq.s32.totalorder %s16, 0
      %p204 = por %p202, %p203
      %p205 = scmp.ne.s32.totalorder %s194, %s197
      %p206 = scmp.eq.s32.totalorder %s21, 1
      %p207 = por %p205, %p206
      %p208 = scmp.ne.s32.totalorder %s197, %s198
      %p209 = scmp.eq.s32.totalorder %s21, 0
      %p210 = por %p208, %p209
      %p211 = scmp.ne.s32.totalorder %s197, %s198
      %p212 = scmp.eq.s32.totalorder %s22, 1
      %p213 = por %p211, %p212
      %p215 = scmp.ne.s32.totalorder %s198, %s214
      %p216 = scmp.eq.s32.totalorder %s22, 0
      %p217 = por %p215, %p216
      %p218 = scmp.le.s32.totalorder 1, %s16
      %p219 = scmp.lt.s32.totalorder %s16, 3
      %p220 = pnand %p218, %p219
      %p221 = pneg %p220
      // Predicated region
      $region9: #{tpu_custom_call.1} parent=5 // pred_check
        _
      $region10: #{tpu_custom_call.1} parent=5 // pred_check_branch
        %223 = sbr.rel (%p220) target = $region12
      $region11: #{tpu_custom_call.1} parent=5 // pred_region
        %s224 = ssub.s32 %s16, 1
        // Predicated region
        $region13: #{tpu_custom_call.1} parent=11 // pred_check
          %p225 = pneg %p54
        $region14: #{tpu_custom_call.1} parent=11 // pred_check_branch
          %227 = sbr.rel (%p225) target = $region16
        $region15: #{tpu_custom_call.1} parent=11 // pred_region
          %s229 = ssub.s32 128, 128
          %230 = vsyncadd [#allocation3], %s229
          %s231 = smul.addr %s25, 128
          %s232 = scalar_lea.hbm %s0, %s231
          %s234 = sshll.u32 [#allocation2], 4
          %s235 = int_to_ptr.vmem [resolvable:$true] %s234
          %237 = dma.hbm_to_vmem [thread:$0]  %s232, 128, %s235, [#allocation3]
        $region16: #{tpu_custom_call.1} parent=11 // pred_fallthru
          _
        // Predicated region
        $region17: #{tpu_custom_call.1} parent=11 // pred_check
          %p238 = pneg %p80
        $region18: #{tpu_custom_call.1} parent=11 // pred_check_branch
          %240 = sbr.rel (%p238) target = $region20
        $region19: #{tpu_custom_call.1} parent=11 // pred_region
          %s242 = ssub.s32 128, 128
          %243 = vsyncadd [#allocation6], %s242
          %s244 = smul.addr %s25, 128
          %s245 = scalar_lea.hbm %s1, %s244
          %s247 = sshll.u32 [#allocation5], 4
          %s248 = int_to_ptr.vmem [resolvable:$true] %s247
          %250 = dma.hbm_to_vmem [thread:$0]  %s245, 128, %s248, [#allocation6]
        $region20: #{tpu_custom_call.1} parent=11 // pred_fallthru
          _
      $region12: #{tpu_custom_call.1} parent=5 // pred_fallthru
        _
      %p251 = scmp.lt.s32.totalorder %s16, 2
      // Predicated region
      $region21: #{tpu_custom_call.1} parent=5 // pred_check
        %p252 = pneg %p251
      $region22: #{tpu_custom_call.1} parent=5 // pred_check_branch
        %254 = sbr.rel (%p252) target = $region24
      $region23: #{tpu_custom_call.1} parent=5 // pred_region
        // Predicated region
        $region25: #{tpu_custom_call.1} parent=23 // pred_check
          %p255 = pneg %p100
        $region26: #{tpu_custom_call.1} parent=23 // pred_check_branch
          %257 = sbr.rel (%p255) target = $region28
        $region27: #{tpu_custom_call.1} parent=23 // pred_region
          %s258 = sand.u32 %s16, 1
          %s259 = scalar_lea.sflag [#allocation3], %s258
          %s260 = sand.u32 %s90, 1
          %s261 = smul.addr %s260, 16
          %s262 = scalar_lea.vmem [#allocation7], %s261
          %s264 = ssub.s32 256, 256
          %265 = vsyncadd %s259, %s264
          %s266 = smul.addr %s24, 2
          %s267 = smul.addr %s266, 128
          %s268 = scalar_lea.hbm %s2, %s267
          %s269 = sshll.u32 %s262, 4
          %s270 = int_to_ptr.vmem [resolvable:$true] %s269
          %275 = dma.hbm_to_vmem [thread:$0]  %s268, 256, %s270, %s259, 128, 128, 8
        $region28: #{tpu_custom_call.1} parent=23 // pred_fallthru
          _
        // Predicated region
        $region29: #{tpu_custom_call.1} parent=23 // pred_check
          %p276 = pneg %p126
        $region30: #{tpu_custom_call.1} parent=23 // pred_check_branch
          %278 = sbr.rel (%p276) target = $region32
        $region31: #{tpu_custom_call.1} parent=23 // pred_region
          %s279 = sand.u32 %s16, 1
          %s280 = scalar_lea.sflag [#allocation3], %s279
          %s281 = sand.u32 %s116, 1
          %s282 = smul.addr %s281, 16
          %s283 = scalar_lea.vmem [#allocation8], %s282
          %s285 = ssub.s32 256, 256
          %286 = vsyncadd %s280, %s285
          %s287 = smul.addr %s24, 2
          %s288 = smul.addr %s287, 128
          %s289 = scalar_lea.hbm %s3, %s288
          %s290 = sshll.u32 %s283, 4
          %s291 = int_to_ptr.vmem [resolvable:$true] %s290
          %296 = dma.hbm_to_vmem [thread:$0]  %s289, 256, %s291, %s280, 128, 128, 8
        $region32: #{tpu_custom_call.1} parent=23 // pred_fallthru
          _
        // Predicated region
        $region33: #{tpu_custom_call.1} parent=23 // pred_check
          %p297 = pneg %p152
        $region34: #{tpu_custom_call.1} parent=23 // pred_check_branch
          %299 = sbr.rel (%p297) target = $region36
        $region35: #{tpu_custom_call.1} parent=23 // pred_region
          %p300 = scmp.lt.s32.totalorder %s24, 1
          %s301 = scalar_select %p300, %s24, 1
          %s302 = scalar_lea.vmem %s4, %s301
        $region36: #{tpu_custom_call.1} parent=23 // pred_fallthru
          _
      $region24: #{tpu_custom_call.1} parent=5 // pred_fallthru
        _
      %p303 = scmp.le.s32.totalorder 1, %s16
      %p304 = scmp.lt.s32.totalorder %s16, 3
      %p305 = pnand %p303, %p304
      %p306 = pneg %p305
      // Predicated region
      $region37: #{tpu_custom_call.1} parent=5 // pred_check
        _
      $region38: #{tpu_custom_call.1} parent=5 // pred_check_branch
        %308 = sbr.rel (%p305) target = $region40
      $region39: #{tpu_custom_call.1} parent=5 // pred_region
        %s309 = ssub.s32 %s16, 1
        // Predicated region
        $region41: #{tpu_custom_call.1} parent=39 // pred_check
          %p310 = pneg %p54
        $region42: #{tpu_custom_call.1} parent=39 // pred_check_branch
          %312 = sbr.rel (%p310) target = $region44
        $region43: #{tpu_custom_call.1} parent=39 // pred_region
          %313 = dma.done [#allocation3], 128
        $region44: #{tpu_custom_call.1} parent=39 // pred_fallthru
          _
        // Predicated region
        $region45: #{tpu_custom_call.1} parent=39 // pred_check
          %p314 = pneg %p80
        $region46: #{tpu_custom_call.1} parent=39 // pred_check_branch
          %316 = sbr.rel (%p314) target = $region48
        $region47: #{tpu_custom_call.1} parent=39 // pred_region
          %317 = dma.done [#allocation6], 128
        $region48: #{tpu_custom_call.1} parent=39 // pred_fallthru
          _
        %s318 = sand.u32 %s21, 1
        %s319 = scalar_lea.sflag [#allocation3], %s318
        %s320 = sand.u32 %s93, 1
        %s321 = smul.addr %s320, 16
        %s322 = scalar_lea.vmem [#allocation7], %s321
        // Predicated region
        $region49: #{tpu_custom_call.1} parent=39 // pred_check
          %p323 = pneg %p106
        $region50: #{tpu_custom_call.1} parent=39 // pred_check_branch
          %325 = sbr.rel (%p323) target = $region52
        $region51: #{tpu_custom_call.1} parent=39 // pred_region
          %326 = dma.done %s319, 256
        $region52: #{tpu_custom_call.1} parent=39 // pred_fallthru
          _
        %s327 = sand.u32 %s21, 1
        %s328 = scalar_lea.sflag [#allocation3], %s327
        %s329 = sand.u32 %s119, 1
        %s330 = smul.addr %s329, 16
        %s331 = scalar_lea.vmem [#allocation8], %s330
        // Predicated region
        $region53: #{tpu_custom_call.1} parent=39 // pred_check
          %p332 = pneg %p132
        $region54: #{tpu_custom_call.1} parent=39 // pred_check_branch
          %334 = sbr.rel (%p332) target = $region56
        $region55: #{tpu_custom_call.1} parent=39 // pred_region
          %335 = dma.done %s328, 256
        $region56: #{tpu_custom_call.1} parent=39 // pred_fallthru
          _
        %p336 = pneg %p54
        %p337 = pneg %p51
        %p338 = pneg %p80
        %p339 = pneg %p77
        %s340 = sand.u32 %s21, 1
        %s341 = scalar_lea.sflag [#allocation3], %s340
        %s342 = sand.u32 %s93, 1
        %s343 = smul.addr %s342, 16
        %s344 = scalar_lea.vmem [#allocation7], %s343
        %p345 = pneg %p106
        %p346 = pneg %p103
        %s347 = sand.u32 %s21, 1
        %s348 = scalar_lea.sflag [#allocation3], %s347
        %s349 = sand.u32 %s119, 1
        %s350 = smul.addr %s349, 16
        %s351 = scalar_lea.vmem [#allocation8], %s350
        %p352 = pneg %p132
        %p353 = pneg %p129
        %p354 = scmp.lt.s32.totalorder %s26, 1
        %s355 = scalar_select %p354, %s26, 1
        %s356 = scalar_lea.vmem %s4, %s355
        %p357 = pneg %p158
        %p358 = pneg %p155
        %p359 = pneg %p184
        %p360 = pneg %p181
        %p361 = pneg %p210
        %p362 = pneg %p207
        %p363 = scmp.lt.s32.totalorder %s25, 0
        %s364 = scalar_select %p363, %s25, 0
        %s365 = smul.addr %s364, 8
        %s366 = scalar_lea.vmem %s6, %s365
        %p367 = scmp.lt.s32.totalorder %s26, 1
        %s368 = scalar_select %p367, %s26, 1
        %s369 = scalar_lea.vmem %s4, %s368
        %p370 = scmp.lt.s32.totalorder %s25, 0
        %s371 = scalar_select %p370, %s25, 0
        %s372 = smul.addr %s371, 8
        %s373 = scalar_lea.vmem %s6, %s372
        %p374 = scmp.eq.s32.totalorder %s26, 0
        // Predicated region
        $region57: #{tpu_custom_call.1} parent=39 // pred_check
          %p375 = pneg %p374
        $region58: #{tpu_custom_call.1} parent=39 // pred_check_branch
          %377 = sbr.rel (%p375) target = $region60
        $region59: #{tpu_custom_call.1} parent=39 // pred_region
          %v378 = vld [vmem:[#allocation2] sm:$0xff]
          %vm379 = vcmask 261120
          %380 = vst.msk [vmem:[#allocation9] sm:$0xff] %vm379, %v378
          %vm381 = vcmask 7168
          %382 = vst.msk [vmem:[%s373] sm:$0xff] %vm381, 0.0
        $region60: #{tpu_custom_call.1} parent=39 // pred_fallthru
          _
        %v383 = vld [vmem:[#allocation9] sm:$0xff]
        %v384 = vld [vmem:[%s322] sm:$0xff]
        %v385 = vld [vmem:[%s322 + $0x8] sm:$0xff]
        %v386 = vld [vmem:[#allocation5] sm:$0xff]
        %v387 = vld [vmem:[%s331] sm:$0xff]
        %v388 = vld [vmem:[%s331 + $0x8] sm:$0xff]
        %vm389 = vcmask 130048
        %v391 = vsel %vm389, %v386, 0
        %393 = vmatprep.subr.mxu0 0.0
        %394 = vmatpush1.msra.mxu0 %v387
        %395 = vmatprep.subr.mxu0 0.0
        %396 = vmatpush1.msra.mxu0 %v388
        %397 = vmatprep.subr.mxu0 0.0
        %398 = vmatpush1.msra.mxu0 0.0
        %399 = vmatprep.subr.mxu0 0.0
        %400 = vmatpush1.msra.mxu0 0.0
        %401 = vmatprep.subr.mxu0 0.0
        %402 = vmatpush1.msra.mxu0 0.0
        %403 = vmatprep.subr.mxu0 0.0
        %404 = vmatpush1.msra.mxu0 0.0
        %405 = vmatprep.subr.mxu0 0.0
        %406 = vmatpush1.msra.mxu0 0.0
        %407 = vmatprep.subr.mxu0 0.0
        %408 = vmatpush1.msra.mxu0 0.0
        %409 = vmatprep.subr.mxu0 0.0
        %410 = vmatpush1.msra.mxu0 0.0
        %411 = vmatprep.subr.mxu0 0.0
        %412 = vmatpush1.msra.mxu0 0.0
        %413 = vmatprep.subr.mxu0 0.0
        %414 = vmatpush1.msra.mxu0 0.0
        %415 = vmatprep.subr.mxu0 0.0
        %416 = vmatpush1.msra.mxu0 0.0
        %417 = vmatprep.subr.mxu0 0.0
        %418 = vmatpush1.msra.mxu0 0.0
        %419 = vmatprep.subr.mxu0 0.0
        %420 = vmatpush1.msra.mxu0 0.0
        %421 = vmatprep.subr.mxu0 0.0
        %422 = vmatpush1.msra.mxu0 0.0
        %423 = vmatprep.subr.mxu0 0.0
        %424 = vmatpush1.msra.mxu0 0.0
        %425 = vmatprep.subr.mxu0 0.0
        %426 = vmatpush1.msra.mxu0 0.0
        %427 = vmatprep.subr.mxu0 0.0
        %428 = vmatpush1.msra.mxu0 0.0
        %429 = vmatprep.subr.mxu0 0.0
        %430 = vmatpush1.msra.mxu0 0.0
        %431 = vmatprep.subr.mxu0 0.0
        %432 = vmatpush1.msra.mxu0 0.0
        %433 = vmatprep.subr.mxu0 0.0
        %434 = vmatpush1.msra.mxu0 0.0
        %435 = vmatprep.subr.mxu0 0.0
        %436 = vmatpush1.msra.mxu0 0.0
        %437 = vmatprep.subr.mxu0 0.0
        %438 = vmatpush1.msra.mxu0 0.0
        %439 = vmatprep.subr.mxu0 0.0
        %440 = vmatpush1.msra.mxu0 0.0
        %441 = vmatprep.subr.mxu0 0.0
        %442 = vmatpush1.msra.mxu0 0.0
        %443 = vmatprep.subr.mxu0 0.0
        %444 = vmatpush1.msra.mxu0 0.0
        %445 = vmatprep.subr.mxu0 0.0
        %446 = vmatpush1.msra.mxu0 0.0
        %447 = vmatprep.subr.mxu0 0.0
        %448 = vmatpush1.msra.mxu0 0.0
        %449 = vmatprep.subr.mxu0 0.0
        %450 = vmatpush1.msra.mxu0 0.0
        %451 = vmatprep.subr.mxu0 0.0
        %452 = vmatpush1.msra.mxu0 0.0
        %453 = vmatprep.subr.mxu0 0.0
        %454 = vmatpush1.msra.mxu0 0.0
        %455 = vmatprep.subr.mxu0 0.0
        %456 = vmatpush1.msra.mxu0 0.0
        %457 = vmatprep.mubr.f32.mxu0 0.0
        %458 = vmatmul.mubr.f32.gmra.mrb[0].mxu0 %v391
        %v459 = vpop.f32.mrb[0].mxu0
        %v460 = vadd.f32 0.0, %v459
        %v461 = vpop.f32.mrb[0].mxu0
        %462 = vdwg.mxu0
        %v464 = vsel %vm389, %v383, 0
        %466 = vmatprep.subr.mxu0 0.0
        %467 = vmatpush1.msra.mxu0 %v384
        %468 = vmatprep.subr.mxu0 0.0
        %469 = vmatpush1.msra.mxu0 %v385
        %470 = vmatprep.subr.mxu0 0.0
        %471 = vmatpush1.msra.mxu0 0.0
        %472 = vmatprep.subr.mxu0 0.0
        %473 = vmatpush1.msra.mxu0 0.0
        %474 = vmatprep.subr.mxu0 0.0
        %475 = vmatpush1.msra.mxu0 0.0
        %476 = vmatprep.subr.mxu0 0.0
        %477 = vmatpush1.msra.mxu0 0.0
        %478 = vmatprep.subr.mxu0 0.0
        %479 = vmatpush1.msra.mxu0 0.0
        %480 = vmatprep.subr.mxu0 0.0
        %481 = vmatpush1.msra.mxu0 0.0
        %482 = vmatprep.subr.mxu0 0.0
        %483 = vmatpush1.msra.mxu0 0.0
        %484 = vmatprep.subr.mxu0 0.0
        %485 = vmatpush1.msra.mxu0 0.0
        %486 = vmatprep.subr.mxu0 0.0
        %487 = vmatpush1.msra.mxu0 0.0
        %488 = vmatprep.subr.mxu0 0.0
        %489 = vmatpush1.msra.mxu0 0.0
        %490 = vmatprep.subr.mxu0 0.0
        %491 = vmatpush1.msra.mxu0 0.0
        %492 = vmatprep.subr.mxu0 0.0
        %493 = vmatpush1.msra.mxu0 0.0
        %494 = vmatprep.subr.mxu0 0.0
        %495 = vmatpush1.msra.mxu0 0.0
        %496 = vmatprep.subr.mxu0 0.0
        %497 = vmatpush1.msra.mxu0 0.0
        %498 = vmatprep.subr.mxu0 0.0
        %499 = vmatpush1.msra.mxu0 0.0
        %500 = vmatprep.subr.mxu0 0.0
        %501 = vmatpush1.msra.mxu0 0.0
        %502 = vmatprep.subr.mxu0 0.0
        %503 = vmatpush1.msra.mxu0 0.0
        %504 = vmatprep.subr.mxu0 0.0
        %505 = vmatpush1.msra.mxu0 0.0
        %506 = vmatprep.subr.mxu0 0.0
        %507 = vmatpush1.msra.mxu0 0.0
        %508 = vmatprep.subr.mxu0 0.0
        %509 = vmatpush1.msra.mxu0 0.0
        %510 = vmatprep.subr.mxu0 0.0
        %511 = vmatpush1.msra.mxu0 0.0
        %512 = vmatprep.subr.mxu0 0.0
        %513 = vmatpush1.msra.mxu0 0.0
        %514 = vmatprep.subr.mxu0 0.0
        %515 = vmatpush1.msra.mxu0 0.0
        %516 = vmatprep.subr.mxu0 0.0
        %517 = vmatpush1.msra.mxu0 0.0
        %518 = vmatprep.subr.mxu0 0.0
        %519 = vmatpush1.msra.mxu0 0.0
        %520 = vmatprep.subr.mxu0 0.0
        %521 = vmatpush1.msra.mxu0 0.0
        %522 = vmatprep.subr.mxu0 0.0
        %523 = vmatpush1.msra.mxu0 0.0
        %524 = vmatprep.subr.mxu0 0.0
        %525 = vmatpush1.msra.mxu0 0.0
        %526 = vmatprep.subr.mxu0 0.0
        %527 = vmatpush1.msra.mxu0 0.0
        %528 = vmatprep.subr.mxu0 0.0
        %529 = vmatpush1.msra.mxu0 0.0
        %530 = vmatprep.mubr.f32.mxu0 0.0
        %531 = vmatmul.mubr.f32.gmra.mrb[0].mxu0 %v464
        %v532 = vpop.f32.mrb[0].mxu0
        %v533 = vadd.f32 %v460, %v532
        %v534 = vpop.f32.mrb[0].mxu0
        %535 = vdwg.mxu0
        %v536 = vld [vmem:[%s369] sm:$0x1]
        %v538 = vlaneseq
        %v539 = vshrl.u32 %v538, 7
        %v540 = vsub.s32 0, %v539
        %v541 = vrot.slane %v536, %v540
        %v543 = vadd.f32 %v533, %v541
        %v544 = vtanh.pop %v543
        %v545 = vmul.f32 %v544, 1.442695
        %v546 = vpow.pop %v545
        %548 = vrot.lane.b32.xlu0 %v546, 16
        %v549 = vpop.permute.xlu0 %548
        %v551 = vmul.f32 %v383, %v549
        %v552 = vadd.f32 %v551, %v543
        %v553 = vld [vmem:[%s373] sm:$0xff]
        %v554 = vsel %vm389, %v544, 0.0
        %555 = vadd.xlane.f32.xlu0 %v554
        %v556 = vpop.xlane.xlu0 %555
        %v557 = vadd.f32 %v553, %v556
        %vm558 = vcmask 7168
        %559 = vst.msk [vmem:[%s373] sm:$0xff] %vm558, %v557
        %561 = vrot.lane.b32.xlu0 %v552, 112
        %v562 = vpop.permute.xlu0 %561
        %564 = vst.msk [vmem:[#allocation9] sm:$0xff] %vm389, %v562
        %565 = vrot.lane.b32.xlu0 %v383, 16
        %v566 = vpop.permute.xlu0 %565
        %vm568 = vcmask 261248
        %569 = vst.msk [vmem:[#allocation9] sm:$0xff] %vm568, %v566
        %p570 = scmp.lt.s32.totalorder %s25, 0
        %s571 = scalar_select %p570, %s25, 0
        %s572 = smul.addr %s571, 8
        %s573 = scalar_lea.vmem %s6, %s572
        // Predicated region
        $region61: #{tpu_custom_call.1} parent=39 // pred_check
          %p574 = pneg %p181
        $region62: #{tpu_custom_call.1} parent=39 // pred_check_branch
          %576 = sbr.rel (%p574) target = $region64
        $region63: #{tpu_custom_call.1} parent=39 // pred_region
          %s578 = ssub.s32 128, 128
          %579 = vsyncadd [#allocation4], %s578
          %s580 = smul.addr %s25, 128
          %s581 = scalar_lea.hbm %s5, %s580
          %s583 = sshll.u32 [#allocation9], 4
          %s584 = int_to_ptr.vmem [resolvable:$true] %s583
          %586 = dma.vmem_to_hbm [thread:$0]  %s584, 128, %s581, [#allocation4]
        $region64: #{tpu_custom_call.1} parent=39 // pred_fallthru
          _
        // Predicated region
        $region65: #{tpu_custom_call.1} parent=39 // pred_check
          %p587 = pneg %p207
        $region66: #{tpu_custom_call.1} parent=39 // pred_check_branch
          %589 = sbr.rel (%p587) target = $region68
        $region67: #{tpu_custom_call.1} parent=39 // pred_region
          _
        $region68: #{tpu_custom_call.1} parent=39 // pred_fallthru
          _
        // Predicated region
        $region69: #{tpu_custom_call.1} parent=39 // pred_check
          %p590 = pneg %p181
        $region70: #{tpu_custom_call.1} parent=39 // pred_check_branch
          %592 = sbr.rel (%p590) target = $region72
        $region71: #{tpu_custom_call.1} parent=39 // pred_region
          %593 = dma.done [#allocation4], 128
        $region72: #{tpu_custom_call.1} parent=39 // pred_fallthru
          _
        // Predicated region
        $region73: #{tpu_custom_call.1} parent=39 // pred_check
          %p594 = pneg %p207
        $region74: #{tpu_custom_call.1} parent=39 // pred_check_branch
          %596 = sbr.rel (%p594) target = $region76
        $region75: #{tpu_custom_call.1} parent=39 // pred_region
          %p597 = scmp.lt.s32.totalorder %s25, 0
          %s598 = scalar_select %p597, %s25, 0
          %s599 = smul.addr %s598, 8
          %s600 = scalar_lea.vmem %s6, %s599
        $region76: #{tpu_custom_call.1} parent=39 // pred_fallthru
          _
      $region40: #{tpu_custom_call.1} parent=5 // pred_fallthru
        _
      %p601 = scmp.le.s32.totalorder 2, %s16
      // Predicated region
      $region77: #{tpu_custom_call.1} parent=5 // pred_check
        %p602 = pneg %p601
      $region78: #{tpu_custom_call.1} parent=5 // pred_check_branch
        %604 = sbr.rel (%p602) target = $region80
      $region79: #{tpu_custom_call.1} parent=5 // pred_region
        %s605 = ssub.s32 %s16, 2
      $region80: #{tpu_custom_call.1} parent=5 // pred_fallthru
        _
    $region6: #{tpu_custom_call.1} parent=1 // loop_footer
      %s20 = sadd.s32 1, %s16
    $region7: #{tpu_custom_call.1} parent=1 // loop_footer_branch
      %15 = sbr.rel target = $region3
    $region8: #{tpu_custom_call.1} parent=1 // loop_exit
      _
    %606 = vsyncpa [#allocation3], 1
    %s607 = scalar_lea.sflag [#allocation3], 1
    %608 = vsyncpa %s607, 1
    %609 = vsyncpa [#allocation6], 1
    %610 = vsyncpa [#allocation4], 1
    %s611 = scalar_lea.sflag [#allocation4], 1
    %612 = vsyncpa %s611, 1

</llo_original>
